<compile_context>
chip_gen: v7x
topology: tpu7x:2x2x1
jax: 0.10.0
libtpu: 0.0.40
codegen_flags: <defaults>
</compile_context>

<pallas_src>
import functools

import jax
import jax.numpy as jnp
from jax import lax
from jax.experimental import pallas as pl
from jax.experimental.pallas import tpu as pltpu


def _white_noise_kernel(scale_ref, noise_ref, x_ref, o_ref, *, tile_rows):
    # scale_ref: VMEM f32[n_ts, 1]       (amplitude * row-selection mask, whole array)
    # noise_ref: VMEM f32[1, tile_cols]  (white-noise row, lane-dense block)
    # x_ref:     VMEM [tile_rows, tile_cols]
    i = pl.program_id(0)
    r0 = pl.multiple_of(i * tile_rows, tile_rows)
    row_scale = scale_ref[pl.ds(r0, tile_rows), :]              # (tile_rows, 1)
    o_ref[...] = x_ref[...] + (row_scale * noise_ref[...]).astype(o_ref.dtype)


def _pick_tile(dim, unit, cap):
    """Largest t <= cap with t % unit == 0 and dim % t == 0; else the full dim."""
    if dim <= cap:
        return dim
    start = max((cap // unit) * unit, unit)
    for t in range(start, unit - 1, -unit):
        if dim % t == 0:
            return t
    return dim  # fall back to a full-dim block (always layout-legal)


def _choose_tiles(n_rows, n_cols, itemsize, max_rows, max_cols, tile_bytes):
    sub_unit = max(8, 32 // itemsize)        # f32: 8, bf16: 16, int8/fp8: 32
    tile_cols = _pick_tile(n_cols, 128, max_cols)
    row_cap = min(max_rows, max(tile_bytes // (tile_cols * itemsize), sub_unit))
    tile_rows = _pick_tile(n_rows, sub_unit, row_cap)
    return tile_rows, tile_cols


@functools.partial(
    jax.jit,
    static_argnames=("p", "amplitude", "f", "max_tile_rows", "max_tile_cols"),
)
def white_noise(data, key, p=0.5, amplitude=0.5, f=1,
                max_tile_rows=512, max_tile_cols=2048):
    n_ts, length = data.shape
    assert f <= n_ts
    itemsize = jnp.dtype(data.dtype).itemsize
    tile_rows, tile_cols = _choose_tiles(
        n_ts, length, itemsize, max_tile_rows, max_tile_cols,
        tile_bytes=2 * 1024 * 1024)
    grid = (n_ts // tile_rows, length // tile_cols)

    k_coin, k_sel, k_noise = jax.random.split(key, 3)
    apply_flag = jax.random.uniform(k_coin, (), dtype=jnp.float32) < p

    def _apply(args):
        d, ks, kn = args
        # np.random.choice(n_ts, f, replace=False) -> per-row selection scale.
        selection = jax.random.permutation(ks, n_ts)[:f]
        mask = jnp.zeros((n_ts,), jnp.float32).at[selection].set(1.0)
        scale = (amplitude * mask).reshape(n_ts, 1)
        # np.random.normal(0, 1, num_samples): one sample per time step.
        noise = jax.random.normal(kn, (length,), dtype=jnp.float32)
        noise = noise.reshape(1, length)

        return pl.pallas_call(
            functools.partial(_white_noise_kernel, tile_rows=tile_rows),
            out_shape=jax.ShapeDtypeStruct((n_ts, length), d.dtype),
            grid_spec=pltpu.PrefetchScalarGridSpec(
                num_scalar_prefetch=0,
                grid=grid,
                in_specs=[
                    # Full-array block, constant index -> DMA'd into VMEM once.
                    pl.BlockSpec((n_ts, 1), lambda i, j: (0, 0)),
                    # Lane-dense noise-row block, re-used for every row tile.
                    pl.BlockSpec((1, tile_cols), lambda i, j: (0, j)),
                    # Data tile.
                    pl.BlockSpec((tile_rows, tile_cols), lambda i, j: (i, j)),
                ],
                out_specs=pl.BlockSpec((tile_rows, tile_cols),
                                       lambda i, j: (i, j)),
            ),
            compiler_params=pltpu.CompilerParams(
                dimension_semantics=("parallel", "parallel"),
                vmem_limit_bytes=32 * 1024 * 1024,
            ),
        )(scale, noise, d)

    def _skip(args):
        d, _, _ = args
        return d

    # Failed coin flip: skip the kernel entirely (no HBM round trip).
    return lax.cond(apply_flag, _apply, _skip, (data, k_sel, k_noise))


def _reference(data, key, p=0.5, amplitude=0.5, f=1):
    """Pure-JAX reference with identical RNG usage, for verification."""
    n_ts, length = data.shape
    k_coin, k_sel, k_noise = jax.random.split(key, 3)
    apply_flag = jax.random.uniform(k_coin, (), dtype=jnp.float32) < p
    selection = jax.random.permutation(k_sel, n_ts)[:f]
    mask = jnp.zeros((n_ts,), jnp.float32).at[selection].set(1.0)
    scale = (amplitude * mask).reshape(n_ts, 1)
    noise = jax.random.normal(k_noise, (length,), dtype=jnp.float32).reshape(1, length)
    return jnp.where(apply_flag, data + (scale * noise).astype(data.dtype), data)


if __name__ == "__main__":
    root = jax.random.PRNGKey(0)
    k_data, k_rng, k_data2, k_rng2 = jax.random.split(root, 4)

    # Small shapes consistent with the module: n_ts time series, each with
    # num_samples points (the noise vector length must match the series length).
    n_ts, num_samples, f = 16, 1024, 2
    data = jax.random.normal(k_data, (n_ts, num_samples), dtype=jnp.float32)

    # p=1.0 forces the coin flip to succeed -> exercises the Pallas kernel path.
    out = jax.block_until_ready(white_noise(data, k_rng, p=1.0, amplitude=0.5, f=f))
    ref = _reference(data, k_rng, p=1.0, amplitude=0.5, f=f)
    assert out.shape == data.shape and out.dtype == data.dtype
    assert jnp.allclose(out, ref, atol=1e-6), "mismatch vs reference (applied path)"
    assert not jnp.allclose(out, data), "noise was not applied"

    # p=0.0 forces the coin flip to fail -> kernel is skipped via lax.cond.
    out_skip = jax.block_until_ready(white_noise(data, k_rng, p=0.0, amplitude=0.5, f=f))
    assert jnp.array_equal(out_skip, data), "skip path must be identity"

    # Multi-block grid (several row/col tiles, exercises r0 > 0 scale slices).
    data2 = jax.random.normal(k_data2, (32, 512), dtype=jnp.float32)
    out2 = jax.block_until_ready(
        white_noise(data2, k_rng2, p=1.0, amplitude=0.5, f=3,
                    max_tile_rows=8, max_tile_cols=256))
    ref2 = _reference(data2, k_rng2, p=1.0, amplitude=0.5, f=3)
    assert jnp.allclose(out2, ref2, atol=1e-6), "mismatch vs reference (tiled path)"

    print("KERNEL_OK")
</pallas_src>

<mosaic_0001>
module attributes {stable_mosaic.version = 11 : i64} {
  func.func @_white_noise_kernel(%arg0: i32, %arg1: i32, %arg2: memref<16x1xf32, #tpu.memory_space<vmem>>, %arg3: memref<1x1024xf32, #tpu.memory_space<vmem>>, %arg4: memref<16x1024xf32, #tpu.memory_space<vmem>>, %arg5: memref<16x1024xf32, #tpu.memory_space<vmem>>) attributes {dimension_semantics = [#tpu.dimension_semantics<parallel>, #tpu.dimension_semantics<parallel>], iteration_bounds = array<i64: 1, 1>, scalar_prefetch = 0 : i64, scratch_operands = 0 : i64, tpu.core_type = #tpu.core_type<tc>, window_params = [{pipeline_mode = #tpu.pipeline_mode<synchronous>, transform_indices = @transform_0, window_bounds = array<i64: 16, 1>}, {transform_indices = @transform_1, window_bounds = array<i64: 1, 1024>}, {transform_indices = @transform_2, window_bounds = array<i64: 16, 1024>}, {transform_indices = @transform_3, window_bounds = array<i64: 16, 1024>}]} {
    %c16_i32 = arith.constant 16 : i32
    %0 = arith.muli %arg0, %c16_i32 : i32
    %1 = tpu.assume_multiple %0, 16 : i32
    %2 = arith.index_cast %1 : i32 to index
    %c0 = arith.constant 0 : index
    %3 = vector.load %arg2[%2, %c0] : memref<16x1xf32, #tpu.memory_space<vmem>>, vector<16x1xf32>
    %c0_0 = arith.constant 0 : index
    %c0_1 = arith.constant 0 : index
    %4 = vector.load %arg4[%c0_0, %c0_1] : memref<16x1024xf32, #tpu.memory_space<vmem>>, vector<16x1024xf32>
    %c0_2 = arith.constant 0 : index
    %c0_3 = arith.constant 0 : index
    %5 = vector.load %arg3[%c0_2, %c0_3] : memref<1x1024xf32, #tpu.memory_space<vmem>>, vector<1x1024xf32>
    %6 = vector.broadcast %3 : vector<16x1xf32> to vector<16x1024xf32>
    %7 = vector.broadcast %5 : vector<1x1024xf32> to vector<16x1024xf32>
    %8 = arith.mulf %6, %7 : vector<16x1024xf32>
    %9 = arith.addf %4, %8 : vector<16x1024xf32>
    %c0_4 = arith.constant 0 : index
    %c0_5 = arith.constant 0 : index
    %10 = vector.load %arg5[%c0_4, %c0_5] : memref<16x1024xf32, #tpu.memory_space<vmem>>, vector<16x1024xf32>
    tpu.vector_store %arg5[%c0_4, %c0_5], %9 {strides = array<i32>} : memref<16x1024xf32, #tpu.memory_space<vmem>>, vector<16x1024xf32>,
    return
  }
  func.func @transform_0(%arg0: i32, %arg1: i32) -> (i32, i32) {
    %c0_i32 = arith.constant 0 : i32
    %c0_i32_0 = arith.constant 0 : i32
    %c0_i32_1 = arith.constant 0 : i32
    return %c0_i32, %c0_i32_0 : i32, i32
  }
  func.func @transform_1(%arg0: i32, %arg1: i32) -> (i32, i32) {
    %c0_i32 = arith.constant 0 : i32
    %c0_i32_0 = arith.constant 0 : i32
    return %c0_i32, %arg1 : i32, i32
  }
  func.func @transform_2(%arg0: i32, %arg1: i32) -> (i32, i32) {
    %c0_i32 = arith.constant 0 : i32
    return %arg0, %arg1 : i32, i32
  }
  func.func @transform_3(%arg0: i32, %arg1: i32) -> (i32, i32) {
    %c0_i32 = arith.constant 0 : i32
    return %arg0, %arg1 : i32, i32
  }
}

</mosaic_0001>

<llo_original>
// kernel: branch_1_fun.1
$region0: #{branch_1_fun.1}
  #allocation0 [shape = 'u32[]', space=smem, size = 0x4, offset = 0x4, fixed_abs, tag = 'smem constant byte address 0x4 - core index']
  #allocation1 [shape = 'u32[144,128]{1,0:T(1,128)}', space=vmem, size = 0x12000, scoped, tag = 'internal scratch']
  %s0 = inlined_call_operand.vmem [shape: f32[16,1], index: 0, kind: input, shape index: {}]
  %s1 = inlined_call_operand.vmem [shape: f32[1,1024], index: 1, kind: input, shape index: {}]
  %s2 = inlined_call_operand.vmem [shape: f32[16,1024], index: 2, kind: input, shape index: {}]
  %s3 = inlined_call_operand.hbm [shape: f32[16,1024], index: 3, kind: output, shape index: {}]
  %s4 = sld [smem:[#allocation0]]
  $region22: #{branch_1_fun.1} parent=0
    _
  %s6 = ssub.s32 1, %s4
  %s7 = scalar_select 0, %s6, %s4
  $region1: #{branch_1_fun.1} parent=0
    #allocation2 [shape = 'u8[65536]{0}', space=vmem, size = 0x10000, scoped, tag = 'output window, operand 0, single buffered']
    #allocation3 [shape = 's32[1]{0}', space=sflag, size = 0x4, scoped, tag = 'scoped memory for branch_1_fun.1']
    %8 = vsyncpa [#allocation3], 0
    // Predicated region
    $region2: #{branch_1_fun.1} parent=1 // pred_check
      _
    $region3: #{branch_1_fun.1} parent=1 // pred_check_branch
      %10 = sbr.rel (0) target = $region5
    $region4: #{branch_1_fun.1} parent=1 // pred_region
      _
    $region5: #{branch_1_fun.1} parent=1 // pred_fallthru
      _
    // Predicated region
    $region6: #{branch_1_fun.1} parent=1 // pred_check
      _
    $region7: #{branch_1_fun.1} parent=1 // pred_check_branch
      %12 = sbr.rel (0) target = $region9
    $region8: #{branch_1_fun.1} parent=1 // pred_region
      _
    $region9: #{branch_1_fun.1} parent=1 // pred_fallthru
      _
    // Predicated region
    $region10: #{branch_1_fun.1} parent=1 // pred_check
      _
    $region11: #{branch_1_fun.1} parent=1 // pred_check_branch
      %14 = sbr.rel (0) target = $region13
    $region12: #{branch_1_fun.1} parent=1 // pred_region
      _
    $region13: #{branch_1_fun.1} parent=1 // pred_fallthru
      _
    %s15 = smul.u32 0, 16
    %s16 = scalar_lea.vmem %s0, %s15
    %v17 = vld [vmem:[%s16] sm:$0xff]
    %v18 = vld [vmem:[%s16 + $0x8] sm:$0xff]
    %v19 = vld [vmem:[%s2] sm:$0xff]
    %v20 = vld [vmem:[%s2 + $0x8] sm:$0xff]
    %v21 = vld [vmem:[%s2 + $0x10] sm:$0xff]
    %v22 = vld [vmem:[%s2 + $0x18] sm:$0xff]
    %v23 = vld [vmem:[%s2 + $0x20] sm:$0xff]
    %v24 = vld [vmem:[%s2 + $0x28] sm:$0xff]
    %v25 = vld [vmem:[%s2 + $0x30] sm:$0xff]
    %v26 = vld [vmem:[%s2 + $0x38] sm:$0xff]
    %v27 = vld [vmem:[%s2 + $0x40] sm:$0xff]
    %v28 = vld [vmem:[%s2 + $0x48] sm:$0xff]
    %v29 = vld [vmem:[%s2 + $0x50] sm:$0xff]
    %v30 = vld [vmem:[%s2 + $0x58] sm:$0xff]
    %v31 = vld [vmem:[%s2 + $0x60] sm:$0xff]
    %v32 = vld [vmem:[%s2 + $0x68] sm:$0xff]
    %v33 = vld [vmem:[%s2 + $0x70] sm:$0xff]
    %v34 = vld [vmem:[%s2 + $0x78] sm:$0xff]
    %v35 = vld [vmem:[%s1] sm:$0xff]
    %37 = vset.pattern.permute.xlu0 0
    %38 = vperm.xlu0 %37, %v17
    %v39 = vpop.permute.xlu0 %38
    %42 = vset.pattern.permute.xlu0 0
    %43 = vperm.xlu0 %42, %v18
    %v44 = vpop.permute.xlu0 %43
    %v47 = vlaneseq
    %v48 = vshrl.u32 %v47, 7
    %v49 = vsub.s32 0, %v48
    %v50 = vrot.slane %v35, %v49
    %v51 = vlaneseq
    %v52 = vshrl.u32 %v51, 7
    %v53 = vsub.s32 1, %v52
    %v54 = vrot.slane %v35, %v53
    %v55 = vlaneseq
    %v56 = vshrl.u32 %v55, 7
    %v57 = vsub.s32 2, %v56
    %v58 = vrot.slane %v35, %v57
    %v59 = vlaneseq
    %v60 = vshrl.u32 %v59, 7
    %v61 = vsub.s32 3, %v60
    %v62 = vrot.slane %v35, %v61
    %v63 = vlaneseq
    %v64 = vshrl.u32 %v63, 7
    %v65 = vsub.s32 4, %v64
    %v66 = vrot.slane %v35, %v65
    %v67 = vlaneseq
    %v68 = vshrl.u32 %v67, 7
    %v69 = vsub.s32 5, %v68
    %v70 = vrot.slane %v35, %v69
    %v71 = vlaneseq
    %v72 = vshrl.u32 %v71, 7
    %v73 = vsub.s32 6, %v72
    %v74 = vrot.slane %v35, %v73
    %v75 = vlaneseq
    %v76 = vshrl.u32 %v75, 7
    %v77 = vsub.s32 7, %v76
    %v78 = vrot.slane %v35, %v77
    %v87 = vmul.f32 %v39, %v50
    %v88 = vmul.f32 %v39, %v54
    %v89 = vmul.f32 %v39, %v58
    %v90 = vmul.f32 %v39, %v62
    %v91 = vmul.f32 %v39, %v66
    %v92 = vmul.f32 %v39, %v70
    %v93 = vmul.f32 %v39, %v74
    %v94 = vmul.f32 %v39, %v78
    %v95 = vmul.f32 %v44, %v50
    %v96 = vmul.f32 %v44, %v54
    %v97 = vmul.f32 %v44, %v58
    %v98 = vmul.f32 %v44, %v62
    %v99 = vmul.f32 %v44, %v66
    %v100 = vmul.f32 %v44, %v70
    %v101 = vmul.f32 %v44, %v74
    %v102 = vmul.f32 %v44, %v78
    %v103 = vadd.f32 %v19, %v87
    %v104 = vadd.f32 %v20, %v88
    %v105 = vadd.f32 %v21, %v89
    %v106 = vadd.f32 %v22, %v90
    %v107 = vadd.f32 %v23, %v91
    %v108 = vadd.f32 %v24, %v92
    %v109 = vadd.f32 %v25, %v93
    %v110 = vadd.f32 %v26, %v94
    %v111 = vadd.f32 %v27, %v95
    %v112 = vadd.f32 %v28, %v96
    %v113 = vadd.f32 %v29, %v97
    %v114 = vadd.f32 %v30, %v98
    %v115 = vadd.f32 %v31, %v99
    %v116 = vadd.f32 %v32, %v100
    %v117 = vadd.f32 %v33, %v101
    %v118 = vadd.f32 %v34, %v102
    %119 = vst [vmem:[#allocation2] sm:$0xff] %v103
    %120 = vst [vmem:[#allocation2 + $0x8] sm:$0xff] %v104
    %121 = vst [vmem:[#allocation2 + $0x10] sm:$0xff] %v105
    %122 = vst [vmem:[#allocation2 + $0x18] sm:$0xff] %v106
    %123 = vst [vmem:[#allocation2 + $0x20] sm:$0xff] %v107
    %124 = vst [vmem:[#allocation2 + $0x28] sm:$0xff] %v108
    %125 = vst [vmem:[#allocation2 + $0x30] sm:$0xff] %v109
    %126 = vst [vmem:[#allocation2 + $0x38] sm:$0xff] %v110
    %127 = vst [vmem:[#allocation2 + $0x40] sm:$0xff] %v111
    %128 = vst [vmem:[#allocation2 + $0x48] sm:$0xff] %v112
    %129 = vst [vmem:[#allocation2 + $0x50] sm:$0xff] %v113
    %130 = vst [vmem:[#allocation2 + $0x58] sm:$0xff] %v114
    %131 = vst [vmem:[#allocation2 + $0x60] sm:$0xff] %v115
    %132 = vst [vmem:[#allocation2 + $0x68] sm:$0xff] %v116
    %133 = vst [vmem:[#allocation2 + $0x70] sm:$0xff] %v117
    %134 = vst [vmem:[#allocation2 + $0x78] sm:$0xff] %v118
    // Predicated region
    $region14: #{branch_1_fun.1} parent=1 // pred_check
      _
    $region15: #{branch_1_fun.1} parent=1 // pred_check_branch
      %136 = sbr.rel (0) target = $region17
    $region16: #{branch_1_fun.1} parent=1 // pred_region
      %s138 = ssub.s32 2048, 2048
      %139 = vsyncadd [#allocation3], %s138
      %s140 = sshll.u32 [#allocation2], 4
      %s141 = int_to_ptr.vmem [resolvable:$true] %s140
      %146 = dma.vmem_to_hbm [thread:$0]  %s141, 2048, %s3, [#allocation3], 1024, 1024, 64
    $region17: #{branch_1_fun.1} parent=1 // pred_fallthru
      _
    // Predicated region
    $region18: #{branch_1_fun.1} parent=1 // pred_check
      _
    $region19: #{branch_1_fun.1} parent=1 // pred_check_branch
      %148 = sbr.rel (0) target = $region21
    $region20: #{branch_1_fun.1} parent=1 // pred_region
      %149 = dma.done [#allocation3], 2048
    $region21: #{branch_1_fun.1} parent=1 // pred_fallthru
      _
    %150 = vsyncpa [#allocation3], 1

</llo_original>
